<compile_context>
chip_gen: v6e
topology: v6e:2x2x1
jax: 0.10.0
libtpu: 0.0.40
codegen_flags: <defaults>
</compile_context>

<pallas_src>
import math

import jax
import jax.numpy as jnp
from jax.experimental import pallas as pl
from jax.experimental.pallas import tpu as pltpu

NEG_SLOPE = 0.01          # PyTorch nn.LeakyReLU default
LANE = 128                # padded hidden-activation width
IN_DIM = 9
OUT_DIM = 7
OUT_PAD = 8               # 7 -> 8 (sublane-friendly, lane-minimal output)
DIMS = [(9, 128), (128, 64), (64, 32), (32, 16), (16, 7)]


def _leaky_relu(x):
    # Valid for slope in (0, 1): max(x, a*x) == leaky_relu(x).
    return jnp.maximum(x, NEG_SLOPE * x)


def _relu(x):
    return jnp.maximum(x, 0.0)


def _round_up(n, m):
    return (n + m - 1) // m * m


def mlp_kernel(x_ref, w1_ref, ws_ref, w5_ref, b_ref, b5_ref, o_ref):
    # x_ref:  [TB, 9]   f32  (unpadded features)
    # w1_ref: [9, 128]  bf16
    # ws_ref: [3,128,128] bf16  (W2..W4 zero-padded to 128x128)
    # w5_ref: [128, 8]  bf16  (W5 zero-padded: in 16->128 rows, out 7->8 cols)
    # b_ref:  [4, 128]  f32   (b1..b4 zero-padded to 128 lanes)
    # b5_ref: [1, 8]    f32
    # o_ref:  [TB, 8]   f32   (only columns 0..6 are meaningful)
    # bf16 MXU operands, f32 accumulation; bias/activation math in f32.
    h = jnp.dot(x_ref[...].astype(jnp.bfloat16), w1_ref[...],
                preferred_element_type=jnp.float32)
    h = _leaky_relu(h + b_ref[0:1, :])

    h = jnp.dot(h.astype(jnp.bfloat16), ws_ref[0],
                preferred_element_type=jnp.float32)
    h = _relu(h + b_ref[1:2, :])

    h = jnp.dot(h.astype(jnp.bfloat16), ws_ref[1],
                preferred_element_type=jnp.float32)
    h = _leaky_relu(h + b_ref[2:3, :])

    h = jnp.dot(h.astype(jnp.bfloat16), ws_ref[2],
                preferred_element_type=jnp.float32)
    h = _relu(h + b_ref[3:4, :])

    h = jnp.dot(h.astype(jnp.bfloat16), w5_ref[...],
                preferred_element_type=jnp.float32)
    o_ref[...] = (h + b5_ref[...]).astype(o_ref.dtype)


def pack_params(params):
    """Pack params into VMEM-resident slabs.

    Weights -> bf16 (MXU operands), biases -> f32.  Zero padding is exact:
    padded rows/cols contribute 0 to every dot product and ReLU/LeakyReLU(0)=0,
    so padded lanes stay zero through the whole chain.
    """
    (w1, b1), (w2, b2), (w3, b3), (w4, b4), (w5, b5) = params

    w1_bf = w1.astype(jnp.bfloat16)                                    # [9,128]

    def pad_w(w):
        return (jnp.zeros((LANE, LANE), jnp.bfloat16)
                .at[: w.shape[0], : w.shape[1]].set(w.astype(jnp.bfloat16)))

    w_slab = jnp.stack([pad_w(w2), pad_w(w3), pad_w(w4)], axis=0)      # [3,128,128]

    w5_pad = (jnp.zeros((LANE, OUT_PAD), jnp.bfloat16)
              .at[: w5.shape[0], : w5.shape[1]].set(w5.astype(jnp.bfloat16)))  # [128,8]

    def pad_b(b):
        return jnp.zeros((LANE,), jnp.float32).at[: b.shape[-1]].set(b.reshape(-1))

    b_slab = jnp.stack([pad_b(b1), pad_b(b2), pad_b(b3), pad_b(b4)], axis=0)   # [4,128]
    b5_pad = (jnp.zeros((1, OUT_PAD), jnp.float32)
              .at[0, : b5.shape[-1]].set(b5.reshape(-1)))                      # [1,8]

    return w1_bf, w_slab, w5_pad, b_slab, b5_pad


def mlp_forward(x, params, *, batch_tile=2048):
    """x: [B, 9] float32. params: list of (W [in,out], b [1,out]) tuples."""
    B, K = x.shape
    out_dim = params[-1][0].shape[1]

    # Batch tile: at most batch_tile rows, multiple of 8 sublanes.  For large B
    # we cap at ceil(B/2) rounded up to 8 so the grid has >= 2 steps and the
    # "parallel" axis can actually shard across both TensorCores on v7x
    # (harmless single-TC on v5e/v6e).  Per-step VMEM at tb=2048 is a few MiB
    # (x, out, resident slabs, intermediates) -- far under the 32 MiB scoped
    # default everywhere, including v7x's 64 MiB physical VMEM.
    tb = min(batch_tile, max(8, _round_up(pl.cdiv(B, 2), 8)))
    b_pad = _round_up(B, tb)

    # Only pad batch rows when needed (no feature-dim pad materialization).
    x_in = x if b_pad == B else jnp.zeros((b_pad, K), x.dtype).at[:B].set(x)

    w1_bf, w_slab, w5_pad, b_slab, b5_pad = pack_params(params)

    grid = (b_pad // tb,)
    out = pl.pallas_call(
        mlp_kernel,
        out_shape=jax.ShapeDtypeStruct((b_pad, OUT_PAD), jnp.float32),
        grid=grid,
        in_specs=[
            pl.BlockSpec((tb, K), lambda i: (i, 0)),              # x: tiled over batch
            pl.BlockSpec((K, LANE), lambda i: (0, 0)),            # w1: resident
            pl.BlockSpec((3, LANE, LANE), lambda i: (0, 0, 0)),   # w2..w4: resident
            pl.BlockSpec((LANE, OUT_PAD), lambda i: (0, 0)),      # w5: resident
            pl.BlockSpec((4, LANE), lambda i: (0, 0)),            # b1..b4: resident
            pl.BlockSpec((1, OUT_PAD), lambda i: (0, 0)),         # b5: resident
        ],
        out_specs=pl.BlockSpec((tb, OUT_PAD), lambda i: (i, 0)),
        compiler_params=pltpu.CompilerParams(
            dimension_semantics=("parallel",),   # megacore sharding on v7x
        ),
    )(x_in, w1_bf, w_slab, w5_pad, b_slab, b5_pad)

    return out[:B, :out_dim]


def init_params(key):
    """Deterministic init matching PyTorch Linear shapes (stored as [in,out])."""
    params = []
    for fan_in, fan_out in DIMS:
        key, kw, kb = jax.random.split(key, 3)
        bound = 1.0 / math.sqrt(fan_in)
        w = jax.random.uniform(kw, (fan_in, fan_out), jnp.float32, -bound, bound)
        b = jax.random.uniform(kb, (1, fan_out), jnp.float32, -bound, bound)
        params.append((w, b))
    return params


def reference_forward_f32(x, params):
    """Pure f32 reference (matches PyTorch semantics)."""
    h = x
    acts = [_leaky_relu, _relu, _leaky_relu, _relu, None]
    for (w, b), act in zip(params, acts):
        h = h @ w + b
        if act is not None:
            h = act(h)
    return h


def reference_forward_bf16(x, params):
    """Reference mirroring the kernel's bf16-operand / f32-accumulate math."""
    h = x
    acts = [_leaky_relu, _relu, _leaky_relu, _relu, None]
    for (w, b), act in zip(params, acts):
        h = jnp.dot(h.astype(jnp.bfloat16), w.astype(jnp.bfloat16),
                    preferred_element_type=jnp.float32) + b
        if act is not None:
            h = act(h)
    return h


if __name__ == "__main__":
    key = jax.random.PRNGKey(0)
    key, kx = jax.random.split(key)

    B = 8
    x = jax.random.normal(kx, (B, 9), dtype=jnp.float32)

    params = init_params(key)

    out = mlp_forward(x, params)
    out = jax.block_until_ready(out)

    ref_bf16 = reference_forward_bf16(x, params)
    ref_f32 = reference_forward_f32(x, params)

    assert out.shape == (B, 7), out.shape
    # Tight check against the bf16-operand / f32-accumulate mirror reference.
    assert jnp.allclose(out, ref_bf16, atol=1e-3, rtol=1e-3), "mismatch vs bf16 reference"
    # Loose sanity check against the full-f32 PyTorch-semantics reference.
    assert jnp.allclose(out, ref_f32, atol=5e-2, rtol=5e-2), "mismatch vs f32 reference"

    print("KERNEL_OK")
</pallas_src>

<mosaic_0001>
module attributes {stable_mosaic.version = 11 : i64} {
  func.func @mlp_kernel(%arg0: i32, %arg1: memref<8x9xf32, #tpu.memory_space<vmem>>, %arg2: memref<9x128xbf16, #tpu.memory_space<vmem>>, %arg3: memref<3x128x128xbf16, #tpu.memory_space<vmem>>, %arg4: memref<128x8xbf16, #tpu.memory_space<vmem>>, %arg5: memref<4x128xf32, #tpu.memory_space<vmem>>, %arg6: memref<1x8xf32, #tpu.memory_space<vmem>>, %arg7: memref<8x8xf32, #tpu.memory_space<vmem>>) attributes {dimension_semantics = [#tpu.dimension_semantics<parallel>], iteration_bounds = array<i64: 1>, scalar_prefetch = 0 : i64, scratch_operands = 0 : i64, tpu.core_type = #tpu.core_type<tc>, window_params = [{transform_indices = @transform_0, window_bounds = array<i64: 8, 9>}, {pipeline_mode = #tpu.pipeline_mode<synchronous>, transform_indices = @transform_1, window_bounds = array<i64: 9, 128>}, {pipeline_mode = #tpu.pipeline_mode<synchronous>, transform_indices = @transform_2, window_bounds = array<i64: 3, 128, 128>}, {pipeline_mode = #tpu.pipeline_mode<synchronous>, transform_indices = @transform_3, window_bounds = array<i64: 128, 8>}, {pipeline_mode = #tpu.pipeline_mode<synchronous>, transform_indices = @transform_4, window_bounds = array<i64: 4, 128>}, {pipeline_mode = #tpu.pipeline_mode<synchronous>, transform_indices = @transform_5, window_bounds = array<i64: 1, 8>}, {transform_indices = @transform_6, window_bounds = array<i64: 8, 8>}]} {
    %c0 = arith.constant 0 : index
    %c0_0 = arith.constant 0 : index
    %0 = vector.load %arg1[%c0, %c0_0] : memref<8x9xf32, #tpu.memory_space<vmem>>, vector<8x9xf32>
    %1 = arith.truncf %0 : vector<8x9xf32> to vector<8x9xbf16>
    %c0_1 = arith.constant 0 : index
    %c0_2 = arith.constant 0 : index
    %2 = vector.load %arg2[%c0_1, %c0_2] : memref<9x128xbf16, #tpu.memory_space<vmem>>, vector<9x128xbf16>
    %cst = arith.constant dense<0.000000e+00> : vector<8x128xf32>
    %3 = tpu.matmul %1, %2, %cst {dimension_numbers = #tpu.dot_dimension_numbers<[1], [0], [0], [1], [0, 0, 1, 1], [], []>} : vector<8x9xbf16>, vector<9x128xbf16>, vector<8x128xf32> -> vector<8x128xf32>
    %c0_3 = arith.constant 0 : index
    %c0_4 = arith.constant 0 : index
    %4 = vector.load %arg5[%c0_3, %c0_4] : memref<4x128xf32, #tpu.memory_space<vmem>>, vector<1x128xf32>
    %5 = vector.broadcast %4 : vector<1x128xf32> to vector<8x128xf32>
    %6 = arith.addf %3, %5 : vector<8x128xf32>
    %cst_5 = arith.constant 0.00999999977 : f32
    %7 = vector.broadcast %cst_5 : f32 to vector<8x128xf32>
    %8 = arith.mulf %7, %6 : vector<8x128xf32>
    %9 = arith.maximumf %6, %8 : vector<8x128xf32>
    %10 = arith.truncf %9 : vector<8x128xf32> to vector<8x128xbf16>
    %c0_6 = arith.constant 0 : index
    %c0_7 = arith.constant 0 : index
    %c0_8 = arith.constant 0 : index
    %11 = vector.load %arg3[%c0_6, %c0_7, %c0_8] : memref<3x128x128xbf16, #tpu.memory_space<vmem>>, vector<1x128x128xbf16>
    %12 = vector.shape_cast %11 : vector<1x128x128xbf16> to vector<128x128xbf16>
    %cst_9 = arith.constant dense<0.000000e+00> : vector<8x128xf32>
    %13 = tpu.matmul %10, %12, %cst_9 {dimension_numbers = #tpu.dot_dimension_numbers<[1], [0], [0], [1], [0, 0, 1, 1], [], []>} : vector<8x128xbf16>, vector<128x128xbf16>, vector<8x128xf32> -> vector<8x128xf32>
    %c1 = arith.constant 1 : index
    %c0_10 = arith.constant 0 : index
    %14 = vector.load %arg5[%c1, %c0_10] : memref<4x128xf32, #tpu.memory_space<vmem>>, vector<1x128xf32>
    %15 = vector.broadcast %14 : vector<1x128xf32> to vector<8x128xf32>
    %16 = arith.addf %13, %15 : vector<8x128xf32>
    %cst_11 = arith.constant 0.000000e+00 : f32
    %17 = vector.broadcast %cst_11 : f32 to vector<8x128xf32>
    %18 = arith.maximumf %16, %17 : vector<8x128xf32>
    %19 = arith.truncf %18 : vector<8x128xf32> to vector<8x128xbf16>
    %c1_12 = arith.constant 1 : index
    %c0_13 = arith.constant 0 : index
    %c0_14 = arith.constant 0 : index
    %20 = vector.load %arg3[%c1_12, %c0_13, %c0_14] : memref<3x128x128xbf16, #tpu.memory_space<vmem>>, vector<1x128x128xbf16>
    %21 = vector.shape_cast %20 : vector<1x128x128xbf16> to vector<128x128xbf16>
    %cst_15 = arith.constant dense<0.000000e+00> : vector<8x128xf32>
    %22 = tpu.matmul %19, %21, %cst_15 {dimension_numbers = #tpu.dot_dimension_numbers<[1], [0], [0], [1], [0, 0, 1, 1], [], []>} : vector<8x128xbf16>, vector<128x128xbf16>, vector<8x128xf32> -> vector<8x128xf32>
    %c2 = arith.constant 2 : index
    %c0_16 = arith.constant 0 : index
    %23 = vector.load %arg5[%c2, %c0_16] : memref<4x128xf32, #tpu.memory_space<vmem>>, vector<1x128xf32>
    %24 = vector.broadcast %23 : vector<1x128xf32> to vector<8x128xf32>
    %25 = arith.addf %22, %24 : vector<8x128xf32>
    %cst_17 = arith.constant 0.00999999977 : f32
    %26 = vector.broadcast %cst_17 : f32 to vector<8x128xf32>
    %27 = arith.mulf %26, %25 : vector<8x128xf32>
    %28 = arith.maximumf %25, %27 : vector<8x128xf32>
    %29 = arith.truncf %28 : vector<8x128xf32> to vector<8x128xbf16>
    %c2_18 = arith.constant 2 : index
    %c0_19 = arith.constant 0 : index
    %c0_20 = arith.constant 0 : index
    %30 = vector.load %arg3[%c2_18, %c0_19, %c0_20] : memref<3x128x128xbf16, #tpu.memory_space<vmem>>, vector<1x128x128xbf16>
    %31 = vector.shape_cast %30 : vector<1x128x128xbf16> to vector<128x128xbf16>
    %cst_21 = arith.constant dense<0.000000e+00> : vector<8x128xf32>
    %32 = tpu.matmul %29, %31, %cst_21 {dimension_numbers = #tpu.dot_dimension_numbers<[1], [0], [0], [1], [0, 0, 1, 1], [], []>} : vector<8x128xbf16>, vector<128x128xbf16>, vector<8x128xf32> -> vector<8x128xf32>
    %c3 = arith.constant 3 : index
    %c0_22 = arith.constant 0 : index
    %33 = vector.load %arg5[%c3, %c0_22] : memref<4x128xf32, #tpu.memory_space<vmem>>, vector<1x128xf32>
    %34 = vector.broadcast %33 : vector<1x128xf32> to vector<8x128xf32>
    %35 = arith.addf %32, %34 : vector<8x128xf32>
    %cst_23 = arith.constant 0.000000e+00 : f32
    %36 = vector.broadcast %cst_23 : f32 to vector<8x128xf32>
    %37 = arith.maximumf %35, %36 : vector<8x128xf32>
    %38 = arith.truncf %37 : vector<8x128xf32> to vector<8x128xbf16>
    %c0_24 = arith.constant 0 : index
    %c0_25 = arith.constant 0 : index
    %39 = vector.load %arg4[%c0_24, %c0_25] : memref<128x8xbf16, #tpu.memory_space<vmem>>, vector<128x8xbf16>
    %cst_26 = arith.constant dense<0.000000e+00> : vector<8x8xf32>
    %40 = tpu.matmul %38, %39, %cst_26 {dimension_numbers = #tpu.dot_dimension_numbers<[1], [0], [0], [1], [0, 0, 1, 1], [], []>} : vector<8x128xbf16>, vector<128x8xbf16>, vector<8x8xf32> -> vector<8x8xf32>
    %c0_27 = arith.constant 0 : index
    %c0_28 = arith.constant 0 : index
    %41 = vector.load %arg6[%c0_27, %c0_28] : memref<1x8xf32, #tpu.memory_space<vmem>>, vector<1x8xf32>
    %42 = vector.broadcast %41 : vector<1x8xf32> to vector<8x8xf32>
    %43 = arith.addf %40, %42 : vector<8x8xf32>
    %c0_29 = arith.constant 0 : index
    %c0_30 = arith.constant 0 : index
    %44 = vector.load %arg7[%c0_29, %c0_30] : memref<8x8xf32, #tpu.memory_space<vmem>>, vector<8x8xf32>
    tpu.vector_store %arg7[%c0_29, %c0_30], %43 {strides = array<i32>} : memref<8x8xf32, #tpu.memory_space<vmem>>, vector<8x8xf32>,
    return
  }
  func.func @transform_0(%arg0: i32) -> (i32, i32) {
    %c0_i32 = arith.constant 0 : i32
    %c0_i32_0 = arith.constant 0 : i32
    return %arg0, %c0_i32 : i32, i32
  }
  func.func @transform_1(%arg0: i32) -> (i32, i32) {
    %c0_i32 = arith.constant 0 : i32
    %c0_i32_0 = arith.constant 0 : i32
    %c0_i32_1 = arith.constant 0 : i32
    return %c0_i32, %c0_i32_0 : i32, i32
  }
  func.func @transform_2(%arg0: i32) -> (i32, i32, i32) {
    %c0_i32 = arith.constant 0 : i32
    %c0_i32_0 = arith.constant 0 : i32
    %c0_i32_1 = arith.constant 0 : i32
    %c0_i32_2 = arith.constant 0 : i32
    return %c0_i32, %c0_i32_0, %c0_i32_1 : i32, i32, i32
  }
  func.func @transform_3(%arg0: i32) -> (i32, i32) {
    %c0_i32 = arith.constant 0 : i32
    %c0_i32_0 = arith.constant 0 : i32
    %c0_i32_1 = arith.constant 0 : i32
    return %c0_i32, %c0_i32_0 : i32, i32
  }
  func.func @transform_4(%arg0: i32) -> (i32, i32) {
    %c0_i32 = arith.constant 0 : i32
    %c0_i32_0 = arith.constant 0 : i32
    %c0_i32_1 = arith.constant 0 : i32
    return %c0_i32, %c0_i32_0 : i32, i32
  }
  func.func @transform_5(%arg0: i32) -> (i32, i32) {
    %c0_i32 = arith.constant 0 : i32
    %c0_i32_0 = arith.constant 0 : i32
    %c0_i32_1 = arith.constant 0 : i32
    return %c0_i32, %c0_i32_0 : i32, i32
  }
  func.func @transform_6(%arg0: i32) -> (i32, i32) {
    %c0_i32 = arith.constant 0 : i32
    %c0_i32_0 = arith.constant 0 : i32
    return %arg0, %c0_i32 : i32, i32
  }
}

</mosaic_0001>

<llo_original>
// kernel: tpu_custom_call.1
$region0: #{tpu_custom_call.1}
  #allocation0 [shape = 'u32[]', space=smem, size = 0x4, offset = 0x4, fixed_abs, tag = 'smem constant byte address 0x4 - core index']
  #allocation1 [shape = 'u32[144,128]{1,0:T(1,128)}', space=vmem, size = 0x12000, scoped, tag = 'internal scratch']
  %s0 = inlined_call_operand.vmem [shape: f32[8,9], index: 0, kind: input, shape index: {}]
  %s1 = inlined_call_operand.vmem [shape: bf16[9,128], index: 1, kind: input, shape index: {}]
  %s2 = inlined_call_operand.hbm [shape: bf16[3,128,128], index: 2, kind: input, shape index: {}]
  %s3 = inlined_call_operand.vmem [shape: bf16[128,8], index: 3, kind: input, shape index: {}]
  %s4 = inlined_call_operand.vmem [shape: f32[4,128], index: 4, kind: input, shape index: {}]
  %s5 = inlined_call_operand.vmem [shape: f32[1,8], index: 5, kind: input, shape index: {}]
  %s6 = inlined_call_operand.hbm [shape: f32[8,8], index: 6, kind: output, shape index: {}]
  %s7 = sld [smem:[#allocation0]]
  $region38: #{tpu_custom_call.1} parent=0
    _
  %s9 = ssub.s32 1, %s7
  %s10 = scalar_select 0, %s9, %s7
  $region1: #{tpu_custom_call.1} parent=0
    #allocation2 [shape = 'u8[98304]{0}', space=vmem, size = 0x18000, scoped, tag = 'input window, operand 2, single buffered']
    #allocation3 [shape = 's32[1]{0}', space=sflag, size = 0x4, scoped, tag = 'scoped memory for tpu_custom_call.1']
    #allocation4 [shape = 's32[1]{0}', space=sflag, size = 0x4, scoped, tag = 'scoped memory for tpu_custom_call.1']
    #allocation5 [shape = 'u8[4096]{0}', space=vmem, size = 0x1000, scoped, tag = 'output window, operand 0, single buffered']
    %11 = vsyncpa [#allocation3], 0
    %12 = vsyncpa [#allocation4], 0
    // Predicated region
    $region2: #{tpu_custom_call.1} parent=1 // pred_check
      _
    $region3: #{tpu_custom_call.1} parent=1 // pred_check_branch
      %14 = sbr.rel (0) target = $region5
    $region4: #{tpu_custom_call.1} parent=1 // pred_region
      _
    $region5: #{tpu_custom_call.1} parent=1 // pred_fallthru
      _
    // Predicated region
    $region6: #{tpu_custom_call.1} parent=1 // pred_check
      _
    $region7: #{tpu_custom_call.1} parent=1 // pred_check_branch
      %16 = sbr.rel (0) target = $region9
    $region8: #{tpu_custom_call.1} parent=1 // pred_region
      _
    $region9: #{tpu_custom_call.1} parent=1 // pred_fallthru
      _
    // Predicated region
    $region10: #{tpu_custom_call.1} parent=1 // pred_check
      _
    $region11: #{tpu_custom_call.1} parent=1 // pred_check_branch
      %18 = sbr.rel (0) target = $region13
    $region12: #{tpu_custom_call.1} parent=1 // pred_region
      %s20 = ssub.s32 3072, 3072
      %21 = vsyncadd [#allocation3], %s20
      %s22 = sshll.u32 [#allocation2], 4
      %s23 = int_to_ptr.vmem [resolvable:$true] %s22
      %28 = dma.hbm_to_vmem [thread:$0]  %s2, 3072, %s23, [#allocation3], 64, 64, 4
    $region13: #{tpu_custom_call.1} parent=1 // pred_fallthru
      _
    // Predicated region
    $region14: #{tpu_custom_call.1} parent=1 // pred_check
      _
    $region15: #{tpu_custom_call.1} parent=1 // pred_check_branch
      %30 = sbr.rel (0) target = $region17
    $region16: #{tpu_custom_call.1} parent=1 // pred_region
      _
    $region17: #{tpu_custom_call.1} parent=1 // pred_fallthru
      _
    // Predicated region
    $region18: #{tpu_custom_call.1} parent=1 // pred_check
      _
    $region19: #{tpu_custom_call.1} parent=1 // pred_check_branch
      %32 = sbr.rel (0) target = $region21
    $region20: #{tpu_custom_call.1} parent=1 // pred_region
      _
    $region21: #{tpu_custom_call.1} parent=1 // pred_fallthru
      _
    // Predicated region
    $region22: #{tpu_custom_call.1} parent=1 // pred_check
      _
    $region23: #{tpu_custom_call.1} parent=1 // pred_check_branch
      %34 = sbr.rel (0) target = $region25
    $region24: #{tpu_custom_call.1} parent=1 // pred_region
      _
    $region25: #{tpu_custom_call.1} parent=1 // pred_fallthru
      _
    // Predicated region
    $region26: #{tpu_custom_call.1} parent=1 // pred_check
      _
    $region27: #{tpu_custom_call.1} parent=1 // pred_check_branch
      %36 = sbr.rel (0) target = $region29
    $region28: #{tpu_custom_call.1} parent=1 // pred_region
      %37 = dma.done [#allocation3], 3072
    $region29: #{tpu_custom_call.1} parent=1 // pred_fallthru
      _
    %v39 = vld [vmem:[%s0] sm:$0xff]
    %v40 = vpack.c.bf16 %v39, %v39
    %v41 = vld [vmem:[%s1] sm:$0xf]
    %v42 = vld [vmem:[%s1 + $0x4] sm:$0x1]
    %v43 = vld [vmem:[%s4] sm:$0x1]
    %v44 = vlaneseq
    %v45 = vshrl.u32 %v44, 7
    %v46 = vsub.s32 0, %v45
    %v47 = vrot.slane %v43, %v46
    %v50 = vunpack.c.l.b16 %v41
    %v51 = vunpack.c.l.b16 %v42
    %v52 = vpack.c.b16 %v51, %v50
    %vm53 = vcmask 72704
    %v55 = vsel %vm53, %v40, 0
    %vm57 = vcmask 1043456
    %vm58 = vcmask 1044480
    %v59 = vsel %vm57, 4294967295, 65535
    %v60 = vsel %vm58, %v59, 0
    %v62 = vand.u32 %v52, %v60
    %64 = vmatprep.subr.bf16.mxu0 0
    %65 = vmatpush1.bf16.msra.mxu0 0
    %66 = vmatprep.subr.bf16.mxu0 0
    %67 = vmatpush1.bf16.msra.mxu0 0
    %68 = vmatprep.subr.bf16.mxu0 0
    %69 = vmatpush1.bf16.msra.mxu0 0
    %70 = vmatprep.subr.bf16.mxu0 0
    %71 = vmatpush1.bf16.msra.mxu0 0
    %72 = vmatprep.subr.bf16.mxu0 0
    %73 = vmatpush1.bf16.msra.mxu0 0
    %74 = vmatprep.subr.bf16.mxu0 0
    %75 = vmatpush1.bf16.msra.mxu0 0
    %76 = vmatprep.subr.bf16.mxu0 0
    %77 = vmatpush1.bf16.msra.mxu0 0
    %78 = vmatprep.subr.bf16.mxu0 0
    %79 = vmatpush1.bf16.msra.mxu0 %v62
    %80 = vmatprep.subr.bf16.mxu0 0
    %81 = vmatpush2.bf16.msra.mxu0 0
    %82 = vmatprep.subr.bf16.mxu0 0
    %83 = vmatpush2.bf16.msra.mxu0 0
    %84 = vmatprep.subr.bf16.mxu0 0
    %85 = vmatpush2.bf16.msra.mxu0 0
    %86 = vmatprep.subr.bf16.mxu0 0
    %87 = vmatpush2.bf16.msra.mxu0 0
    %88 = vmatprep.subr.bf16.mxu0 0
    %89 = vmatpush2.bf16.msra.mxu0 0
    %90 = vmatprep.subr.bf16.mxu0 0
    %91 = vmatpush2.bf16.msra.mxu0 0
    %92 = vmatprep.subr.bf16.mxu0 0
    %93 = vmatpush2.bf16.msra.mxu0 0
    %94 = vmatprep.subr.bf16.mxu0 0
    %95 = vmatpush2.bf16.msra.mxu0 0
    %96 = vmatprep.mubr.bf16.mxu0 0
    %97 = vmatmul.mubr.bf16.gmra.mxu0 %v55
    %v98 = vpop.f32.mrf.mxu0
    %v99 = vadd.f32 %v47, %v98
    %v100 = vpop.f32.mrf.mxu0
    %v101 = vpop.f32.mrf.mxu0
    %v102 = vpop.f32.mrf.mxu0
    %103 = vdwg.mxu0
    %v104 = vmul.f32 %v99, 0.01
    %v105 = vmax.f32 %v99, %v104
    %v106 = vpack.c.bf16 %v105, %v105
    %v107 = vld [vmem:[#allocation2] sm:$0xf]
    %v108 = vld [vmem:[#allocation2 + $0x4] sm:$0xf]
    %v109 = vld [vmem:[#allocation2 + $0x8] sm:$0xf]
    %v110 = vld [vmem:[#allocation2 + $0xc] sm:$0xf]
    %v111 = vld [vmem:[#allocation2 + $0x10] sm:$0xf]
    %v112 = vld [vmem:[#allocation2 + $0x14] sm:$0xf]
    %v113 = vld [vmem:[#allocation2 + $0x18] sm:$0xf]
    %v114 = vld [vmem:[#allocation2 + $0x1c] sm:$0xf]
    %v115 = vld [vmem:[#allocation2 + $0x20] sm:$0xf]
    %v116 = vld [vmem:[#allocation2 + $0x24] sm:$0xf]
    %v117 = vld [vmem:[#allocation2 + $0x28] sm:$0xf]
    %v118 = vld [vmem:[#allocation2 + $0x2c] sm:$0xf]
    %v119 = vld [vmem:[#allocation2 + $0x30] sm:$0xf]
    %v120 = vld [vmem:[#allocation2 + $0x34] sm:$0xf]
    %v121 = vld [vmem:[#allocation2 + $0x38] sm:$0xf]
    %v122 = vld [vmem:[#allocation2 + $0x3c] sm:$0xf]
    %v123 = vld [vmem:[%s4 + $0x1] sm:$0x1]
    %v124 = vlaneseq
    %v125 = vshrl.u32 %v124, 7
    %v126 = vsub.s32 0, %v125
    %v127 = vrot.slane %v123, %v126
    %v144 = vunpack.c.l.b16 %v107
    %v145 = vunpack.c.l.b16 %v108
    %v146 = vunpack.c.l.b16 %v109
    %v147 = vunpack.c.l.b16 %v110
    %v148 = vunpack.c.l.b16 %v111
    %v149 = vunpack.c.l.b16 %v112
    %v150 = vunpack.c.l.b16 %v113
    %v151 = vunpack.c.l.b16 %v114
    %v152 = vunpack.c.l.b16 %v115
    %v153 = vunpack.c.l.b16 %v116
    %v154 = vunpack.c.l.b16 %v117
    %v155 = vunpack.c.l.b16 %v118
    %v156 = vunpack.c.l.b16 %v119
    %v157 = vunpack.c.l.b16 %v120
    %v158 = vunpack.c.l.b16 %v121
    %v159 = vunpack.c.l.b16 %v122
    %v160 = vpack.c.b16 %v145, %v144
    %v161 = vpack.c.b16 %v147, %v146
    %v162 = vpack.c.b16 %v149, %v148
    %v163 = vpack.c.b16 %v151, %v150
    %v164 = vpack.c.b16 %v153, %v152
    %v165 = vpack.c.b16 %v155, %v154
    %v166 = vpack.c.b16 %v157, %v156
    %v167 = vpack.c.b16 %v159, %v158
    %176 = vmatprep.subr.bf16.mxu0 0
    %177 = vmatpush1.bf16.msra.mxu0 %v167
    %178 = vmatprep.subr.bf16.mxu0 0
    %179 = vmatpush1.bf16.msra.mxu0 %v166
    %180 = vmatprep.subr.bf16.mxu0 0
    %181 = vmatpush1.bf16.msra.mxu0 %v165
    %182 = vmatprep.subr.bf16.mxu0 0
    %183 = vmatpush1.bf16.msra.mxu0 %v164
    %184 = vmatprep.subr.bf16.mxu0 0
    %185 = vmatpush1.bf16.msra.mxu0 %v163
    %186 = vmatprep.subr.bf16.mxu0 0
    %187 = vmatpush1.bf16.msra.mxu0 %v162
    %188 = vmatprep.subr.bf16.mxu0 0
    %189 = vmatpush1.bf16.msra.mxu0 %v161
    %190 = vmatprep.subr.bf16.mxu0 0
    %191 = vmatpush1.bf16.msra.mxu0 %v160
    %192 = vmatprep.subr.bf16.mxu0 0
    %193 = vmatpush2.bf16.msra.mxu0 0
    %194 = vmatprep.subr.bf16.mxu0 0
    %195 = vmatpush2.bf16.msra.mxu0 0
    %196 = vmatprep.subr.bf16.mxu0 0
    %197 = vmatpush2.bf16.msra.mxu0 0
    %198 = vmatprep.subr.bf16.mxu0 0
    %199 = vmatpush2.bf16.msra.mxu0 0
    %200 = vmatprep.subr.bf16.mxu0 0
    %201 = vmatpush2.bf16.msra.mxu0 0
    %202 = vmatprep.subr.bf16.mxu0 0
    %203 = vmatpush2.bf16.msra.mxu0 0
    %204 = vmatprep.subr.bf16.mxu0 0
    %205 = vmatpush2.bf16.msra.mxu0 0
    %206 = vmatprep.subr.bf16.mxu0 0
    %207 = vmatpush2.bf16.msra.mxu0 0
    %208 = vmatprep.mubr.bf16.mxu0 0
    %209 = vmatmul.mubr.bf16.gmra.mxu0 %v106
    %v210 = vpop.f32.mrf.mxu0
    %v211 = vadd.f32 %v127, %v210
    %v212 = vpop.f32.mrf.mxu0
    %v213 = vpop.f32.mrf.mxu0
    %v214 = vpop.f32.mrf.mxu0
    %215 = vdwg.mxu0
    %v216 = vmax.f32 %v211, 0.0
    %v217 = vpack.c.bf16 %v216, %v216
    %s218 = scalar_lea.vmem [#allocation2], 64
    %v219 = vld [vmem:[%s218] sm:$0xf]
    %v220 = vld [vmem:[%s218 + $0x4] sm:$0xf]
    %v221 = vld [vmem:[%s218 + $0x8] sm:$0xf]
    %v222 = vld [vmem:[%s218 + $0xc] sm:$0xf]
    %v223 = vld [vmem:[%s218 + $0x10] sm:$0xf]
    %v224 = vld [vmem:[%s218 + $0x14] sm:$0xf]
    %v225 = vld [vmem:[%s218 + $0x18] sm:$0xf]
    %v226 = vld [vmem:[%s218 + $0x1c] sm:$0xf]
    %v227 = vld [vmem:[%s218 + $0x20] sm:$0xf]
    %v228 = vld [vmem:[%s218 + $0x24] sm:$0xf]
    %v229 = vld [vmem:[%s218 + $0x28] sm:$0xf]
    %v230 = vld [vmem:[%s218 + $0x2c] sm:$0xf]
    %v231 = vld [vmem:[%s218 + $0x30] sm:$0xf]
    %v232 = vld [vmem:[%s218 + $0x34] sm:$0xf]
    %v233 = vld [vmem:[%s218 + $0x38] sm:$0xf]
    %v234 = vld [vmem:[%s218 + $0x3c] sm:$0xf]
    %v235 = vld [vmem:[%s4 + $0x2] sm:$0x1]
    %v236 = vlaneseq
    %v237 = vshrl.u32 %v236, 7
    %v238 = vsub.s32 0, %v237
    %v239 = vrot.slane %v235, %v238
    %v256 = vunpack.c.l.b16 %v219
    %v257 = vunpack.c.l.b16 %v220
    %v258 = vunpack.c.l.b16 %v221
    %v259 = vunpack.c.l.b16 %v222
    %v260 = vunpack.c.l.b16 %v223
    %v261 = vunpack.c.l.b16 %v224
    %v262 = vunpack.c.l.b16 %v225
    %v263 = vunpack.c.l.b16 %v226
    %v264 = vunpack.c.l.b16 %v227
    %v265 = vunpack.c.l.b16 %v228
    %v266 = vunpack.c.l.b16 %v229
    %v267 = vunpack.c.l.b16 %v230
    %v268 = vunpack.c.l.b16 %v231
    %v269 = vunpack.c.l.b16 %v232
    %v270 = vunpack.c.l.b16 %v233
    %v271 = vunpack.c.l.b16 %v234
    %v272 = vpack.c.b16 %v257, %v256
    %v273 = vpack.c.b16 %v259, %v258
    %v274 = vpack.c.b16 %v261, %v260
    %v275 = vpack.c.b16 %v263, %v262
    %v276 = vpack.c.b16 %v265, %v264
    %v277 = vpack.c.b16 %v267, %v266
    %v278 = vpack.c.b16 %v269, %v268
    %v279 = vpack.c.b16 %v271, %v270
    %288 = vmatprep.subr.bf16.mxu0 0
    %289 = vmatpush1.bf16.msra.mxu0 %v279
    %290 = vmatprep.subr.bf16.mxu0 0
    %291 = vmatpush1.bf16.msra.mxu0 %v278
    %292 = vmatprep.subr.bf16.mxu0 0
    %293 = vmatpush1.bf16.msra.mxu0 %v277
    %294 = vmatprep.subr.bf16.mxu0 0
    %295 = vmatpush1.bf16.msra.mxu0 %v276
    %296 = vmatprep.subr.bf16.mxu0 0
    %297 = vmatpush1.bf16.msra.mxu0 %v275
    %298 = vmatprep.subr.bf16.mxu0 0
    %299 = vmatpush1.bf16.msra.mxu0 %v274
    %300 = vmatprep.subr.bf16.mxu0 0
    %301 = vmatpush1.bf16.msra.mxu0 %v273
    %302 = vmatprep.subr.bf16.mxu0 0
    %303 = vmatpush1.bf16.msra.mxu0 %v272
    %304 = vmatprep.subr.bf16.mxu0 0
    %305 = vmatpush2.bf16.msra.mxu0 0
    %306 = vmatprep.subr.bf16.mxu0 0
    %307 = vmatpush2.bf16.msra.mxu0 0
    %308 = vmatprep.subr.bf16.mxu0 0
    %309 = vmatpush2.bf16.msra.mxu0 0
    %310 = vmatprep.subr.bf16.mxu0 0
    %311 = vmatpush2.bf16.msra.mxu0 0
    %312 = vmatprep.subr.bf16.mxu0 0
    %313 = vmatpush2.bf16.msra.mxu0 0
    %314 = vmatprep.subr.bf16.mxu0 0
    %315 = vmatpush2.bf16.msra.mxu0 0
    %316 = vmatprep.subr.bf16.mxu0 0
    %317 = vmatpush2.bf16.msra.mxu0 0
    %318 = vmatprep.subr.bf16.mxu0 0
    %319 = vmatpush2.bf16.msra.mxu0 0
    %320 = vmatprep.mubr.bf16.mxu0 0
    %321 = vmatmul.mubr.bf16.gmra.mxu0 %v217
    %v322 = vpop.f32.mrf.mxu0
    %v323 = vadd.f32 %v239, %v322
    %v324 = vpop.f32.mrf.mxu0
    %v325 = vpop.f32.mrf.mxu0
    %v326 = vpop.f32.mrf.mxu0
    %327 = vdwg.mxu0
    %v328 = vmul.f32 %v323, 0.01
    %v329 = vmax.f32 %v323, %v328
    %v330 = vpack.c.bf16 %v329, %v329
    %s331 = scalar_lea.vmem [#allocation2], 128
    %v332 = vld [vmem:[%s331] sm:$0xf]
    %v333 = vld [vmem:[%s331 + $0x4] sm:$0xf]
    %v334 = vld [vmem:[%s331 + $0x8] sm:$0xf]
    %v335 = vld [vmem:[%s331 + $0xc] sm:$0xf]
    %v336 = vld [vmem:[%s331 + $0x10] sm:$0xf]
    %v337 = vld [vmem:[%s331 + $0x14] sm:$0xf]
    %v338 = vld [vmem:[%s331 + $0x18] sm:$0xf]
    %v339 = vld [vmem:[%s331 + $0x1c] sm:$0xf]
    %v340 = vld [vmem:[%s331 + $0x20] sm:$0xf]
    %v341 = vld [vmem:[%s331 + $0x24] sm:$0xf]
    %v342 = vld [vmem:[%s331 + $0x28] sm:$0xf]
    %v343 = vld [vmem:[%s331 + $0x2c] sm:$0xf]
    %v344 = vld [vmem:[%s331 + $0x30] sm:$0xf]
    %v345 = vld [vmem:[%s331 + $0x34] sm:$0xf]
    %v346 = vld [vmem:[%s331 + $0x38] sm:$0xf]
    %v347 = vld [vmem:[%s331 + $0x3c] sm:$0xf]
    %v348 = vld [vmem:[%s4 + $0x3] sm:$0x1]
    %v349 = vlaneseq
    %v350 = vshrl.u32 %v349, 7
    %v351 = vsub.s32 0, %v350
    %v352 = vrot.slane %v348, %v351
    %v369 = vunpack.c.l.b16 %v332
    %v370 = vunpack.c.l.b16 %v333
    %v371 = vunpack.c.l.b16 %v334
    %v372 = vunpack.c.l.b16 %v335
    %v373 = vunpack.c.l.b16 %v336
    %v374 = vunpack.c.l.b16 %v337
    %v375 = vunpack.c.l.b16 %v338
    %v376 = vunpack.c.l.b16 %v339
    %v377 = vunpack.c.l.b16 %v340
    %v378 = vunpack.c.l.b16 %v341
    %v379 = vunpack.c.l.b16 %v342
    %v380 = vunpack.c.l.b16 %v343
    %v381 = vunpack.c.l.b16 %v344
    %v382 = vunpack.c.l.b16 %v345
    %v383 = vunpack.c.l.b16 %v346
    %v384 = vunpack.c.l.b16 %v347
    %v385 = vpack.c.b16 %v370, %v369
    %v386 = vpack.c.b16 %v372, %v371
    %v387 = vpack.c.b16 %v374, %v373
    %v388 = vpack.c.b16 %v376, %v375
    %v389 = vpack.c.b16 %v378, %v377
    %v390 = vpack.c.b16 %v380, %v379
    %v391 = vpack.c.b16 %v382, %v381
    %v392 = vpack.c.b16 %v384, %v383
    %401 = vmatprep.subr.bf16.mxu0 0
    %402 = vmatpush1.bf16.msra.mxu0 %v392
    %403 = vmatprep.subr.bf16.mxu0 0
    %404 = vmatpush1.bf16.msra.mxu0 %v391
    %405 = vmatprep.subr.bf16.mxu0 0
    %406 = vmatpush1.bf16.msra.mxu0 %v390
    %407 = vmatprep.subr.bf16.mxu0 0
    %408 = vmatpush1.bf16.msra.mxu0 %v389
    %409 = vmatprep.subr.bf16.mxu0 0
    %410 = vmatpush1.bf16.msra.mxu0 %v388
    %411 = vmatprep.subr.bf16.mxu0 0
    %412 = vmatpush1.bf16.msra.mxu0 %v387
    %413 = vmatprep.subr.bf16.mxu0 0
    %414 = vmatpush1.bf16.msra.mxu0 %v386
    %415 = vmatprep.subr.bf16.mxu0 0
    %416 = vmatpush1.bf16.msra.mxu0 %v385
    %417 = vmatprep.subr.bf16.mxu0 0
    %418 = vmatpush2.bf16.msra.mxu0 0
    %419 = vmatprep.subr.bf16.mxu0 0
    %420 = vmatpush2.bf16.msra.mxu0 0
    %421 = vmatprep.subr.bf16.mxu0 0
    %422 = vmatpush2.bf16.msra.mxu0 0
    %423 = vmatprep.subr.bf16.mxu0 0
    %424 = vmatpush2.bf16.msra.mxu0 0
    %425 = vmatprep.subr.bf16.mxu0 0
    %426 = vmatpush2.bf16.msra.mxu0 0
    %427 = vmatprep.subr.bf16.mxu0 0
    %428 = vmatpush2.bf16.msra.mxu0 0
    %429 = vmatprep.subr.bf16.mxu0 0
    %430 = vmatpush2.bf16.msra.mxu0 0
    %431 = vmatprep.subr.bf16.mxu0 0
    %432 = vmatpush2.bf16.msra.mxu0 0
    %433 = vmatprep.mubr.bf16.mxu0 0
    %434 = vmatmul.mubr.bf16.gmra.mxu0 %v330
    %v435 = vpop.f32.mrf.mxu0
    %v436 = vadd.f32 %v352, %v435
    %v437 = vpop.f32.mrf.mxu0
    %v438 = vpop.f32.mrf.mxu0
    %v439 = vpop.f32.mrf.mxu0
    %440 = vdwg.mxu0
    %v441 = vmax.f32 %v436, 0.0
    %v442 = vpack.c.bf16 %v441, %v441
    %v443 = vld [vmem:[%s3] sm:$0xf]
    %v444 = vld [vmem:[%s3 + $0x4] sm:$0xf]
    %v445 = vld [vmem:[%s3 + $0x8] sm:$0xf]
    %v446 = vld [vmem:[%s3 + $0xc] sm:$0xf]
    %v447 = vld [vmem:[%s3 + $0x10] sm:$0xf]
    %v448 = vld [vmem:[%s3 + $0x14] sm:$0xf]
    %v449 = vld [vmem:[%s3 + $0x18] sm:$0xf]
    %v450 = vld [vmem:[%s3 + $0x1c] sm:$0xf]
    %v451 = vld [vmem:[%s3 + $0x20] sm:$0xf]
    %v452 = vld [vmem:[%s3 + $0x24] sm:$0xf]
    %v453 = vld [vmem:[%s3 + $0x28] sm:$0xf]
    %v454 = vld [vmem:[%s3 + $0x2c] sm:$0xf]
    %v455 = vld [vmem:[%s3 + $0x30] sm:$0xf]
    %v456 = vld [vmem:[%s3 + $0x34] sm:$0xf]
    %v457 = vld [vmem:[%s3 + $0x38] sm:$0xf]
    %v458 = vld [vmem:[%s3 + $0x3c] sm:$0xf]
    %v459 = vld [vmem:[%s5] sm:$0x1]
    %v461 = vlaneseq
    %v462 = vshrl.u32 %v461, 7
    %v463 = vsub.s32 0, %v462
    %v464 = vrot.slane %v459, %v463
    %v482 = vunpack.c.l.b16 %v443
    %v483 = vunpack.c.l.b16 %v444
    %v484 = vunpack.c.l.b16 %v445
    %v485 = vunpack.c.l.b16 %v446
    %v486 = vunpack.c.l.b16 %v447
    %v487 = vunpack.c.l.b16 %v448
    %v488 = vunpack.c.l.b16 %v449
    %v489 = vunpack.c.l.b16 %v450
    %v490 = vunpack.c.l.b16 %v451
    %v491 = vunpack.c.l.b16 %v452
    %v492 = vunpack.c.l.b16 %v453
    %v493 = vunpack.c.l.b16 %v454
    %v494 = vunpack.c.l.b16 %v455
    %v495 = vunpack.c.l.b16 %v456
    %v496 = vunpack.c.l.b16 %v457
    %v497 = vunpack.c.l.b16 %v458
    %v498 = vpack.c.b16 %v483, %v482
    %v499 = vpack.c.b16 %v485, %v484
    %v500 = vpack.c.b16 %v487, %v486
    %v501 = vpack.c.b16 %v489, %v488
    %v502 = vpack.c.b16 %v491, %v490
    %v503 = vpack.c.b16 %v493, %v492
    %v504 = vpack.c.b16 %v495, %v494
    %v505 = vpack.c.b16 %v497, %v496
    %514 = vmatprep.subr.bf16.mxu0 0
    %515 = vmatpush1.bf16.msra.mxu0 %v505
    %516 = vmatprep.subr.bf16.mxu0 0
    %517 = vmatpush1.bf16.msra.mxu0 %v504
    %518 = vmatprep.subr.bf16.mxu0 0
    %519 = vmatpush1.bf16.msra.mxu0 %v503
    %520 = vmatprep.subr.bf16.mxu0 0
    %521 = vmatpush1.bf16.msra.mxu0 %v502
    %522 = vmatprep.subr.bf16.mxu0 0
    %523 = vmatpush1.bf16.msra.mxu0 %v501
    %524 = vmatprep.subr.bf16.mxu0 0
    %525 = vmatpush1.bf16.msra.mxu0 %v500
    %526 = vmatprep.subr.bf16.mxu0 0
    %527 = vmatpush1.bf16.msra.mxu0 %v499
    %528 = vmatprep.subr.bf16.mxu0 0
    %529 = vmatpush1.bf16.msra.mxu0 %v498
    %530 = vmatprep.subr.bf16.mxu0 0
    %531 = vmatpush2.bf16.msra.mxu0 0
    %532 = vmatprep.subr.bf16.mxu0 0
    %533 = vmatpush2.bf16.msra.mxu0 0
    %534 = vmatprep.subr.bf16.mxu0 0
    %535 = vmatpush2.bf16.msra.mxu0 0
    %536 = vmatprep.subr.bf16.mxu0 0
    %537 = vmatpush2.bf16.msra.mxu0 0
    %538 = vmatprep.subr.bf16.mxu0 0
    %539 = vmatpush2.bf16.msra.mxu0 0
    %540 = vmatprep.subr.bf16.mxu0 0
    %541 = vmatpush2.bf16.msra.mxu0 0
    %542 = vmatprep.subr.bf16.mxu0 0
    %543 = vmatpush2.bf16.msra.mxu0 0
    %544 = vmatprep.subr.bf16.mxu0 0
    %545 = vmatpush2.bf16.msra.mxu0 0
    %546 = vmatprep.mubr.bf16.mxu0 0
    %547 = vmatmul.mubr.bf16.gmra.mxu0 %v442
    %v548 = vpop.f32.mrf.mxu0
    %v549 = vadd.f32 %v464, %v548
    %v550 = vpop.f32.mrf.mxu0
    %v551 = vpop.f32.mrf.mxu0
    %v552 = vpop.f32.mrf.mxu0
    %553 = vdwg.mxu0
    %vm554 = vcmask 64512
    %555 = vst.msk [vmem:[#allocation5] sm:$0xff] %vm554, %v549
    // Predicated region
    $region30: #{tpu_custom_call.1} parent=1 // pred_check
      _
    $region31: #{tpu_custom_call.1} parent=1 // pred_check_branch
      %557 = sbr.rel (0) target = $region33
    $region32: #{tpu_custom_call.1} parent=1 // pred_region
      %s559 = ssub.s32 128, 128
      %560 = vsyncadd [#allocation4], %s559
      %s562 = sshll.u32 [#allocation5], 4
      %s563 = int_to_ptr.vmem [resolvable:$true] %s562
      %565 = dma.vmem_to_hbm [thread:$0]  %s563, 128, %s6, [#allocation4]
    $region33: #{tpu_custom_call.1} parent=1 // pred_fallthru
      _
    // Predicated region
    $region34: #{tpu_custom_call.1} parent=1 // pred_check
      _
    $region35: #{tpu_custom_call.1} parent=1 // pred_check_branch
      %567 = sbr.rel (0) target = $region37
    $region36: #{tpu_custom_call.1} parent=1 // pred_region
      %568 = dma.done [#allocation4], 128
    $region37: #{tpu_custom_call.1} parent=1 // pred_fallthru
      _
    %569 = vsyncpa [#allocation3], 1
    %570 = vsyncpa [#allocation4], 1

</llo_original>
